<compile_context>
chip_gen: v5e
topology: v5e:2x2
jax: 0.10.0
libtpu: 0.0.40
codegen_flags: <defaults>
</compile_context>

<pallas_src>
import jax
import jax.numpy as jnp
from jax import lax
from jax.experimental import pallas as pl
from jax.experimental.pallas import tpu as pltpu


def _make_kernels(C, T, R, offsets, n_x):
    """Builds the stats / fused kernels, closing over static layout constants.

    offsets is a tuple of lane shifts (stride==1 path: kernel gets [body, halo] refs),
    or None (stride>1 fallback: kernel gets K pre-decimated tap refs).
    """

    def _gather_taps(x_refs):
        # Build the [C*K, T] bf16 conv operand for this lane tile.
        if offsets is None:
            return jnp.concatenate([r[...] for r in x_refs], axis=0)
        xw = jnp.concatenate([x_refs[0][...], x_refs[1][...]], axis=1)  # [C, T+halo]
        return jnp.concatenate([xw[:, o:o + T] for o in offsets], axis=0)

    def stats_kernel(*refs):
        x_refs = refs[:n_x]
        w_ref, m0_ref = refs[n_x], refs[n_x + 1]
        usum_ref, usq_ref = refs[n_x + 2], refs[n_x + 3]
        a = _gather_taps(x_refs)
        y = jnp.dot(w_ref[...], a, preferred_element_type=jnp.float32)   # [2C, T]
        u = y - m0_ref[...]                                              # shifted stats
        lane = lax.broadcasted_iota(jnp.int32, (1, T), 1) + pl.program_id(0) * T
        u = jnp.where(lane < R, u, 0.0)                                  # mask pad lanes
        usum_ref[...] = jnp.sum(u, axis=1, keepdims=True)[None]          # (1, 2C, 1)
        usq_ref[...] = jnp.sum(u * u, axis=1, keepdims=True)[None]

    def fused_kernel(*refs):
        x_refs = refs[:n_x]
        w_ref, sc_ref, sh_ref = refs[n_x], refs[n_x + 1], refs[n_x + 2]
        o_ref = refs[n_x + 3]
        a = _gather_taps(x_refs)
        y = jnp.dot(w_ref[...], a, preferred_element_type=jnp.float32)   # [2C, T]
        z = y * sc_ref[...] + sh_ref[...]                                # folded BN
        o_ref[...] = (jnp.tanh(z[:C]) * jax.nn.sigmoid(z[C:])).astype(o_ref.dtype)

    return stats_kernel, fused_kernel


def gdc_forward(x, weight, bias, gamma, beta, *, time_strides, dilation, padding,
                eps=1e-5, lane_tile=4096, out_dtype=jnp.float32):
    """x: [N, C, H, W] (NCHW).  Returns [N, C, H, W_out] (NCHW)."""
    del bias  # cancels exactly under train-mode BatchNorm (see header note)
    N, C, H, W = x.shape
    C2, Cin, kh, K = weight.shape
    assert Cin == C and kh == 1 and C2 == 2 * C
    s, d, p = time_strides, dilation, padding

    W_pad = W + 2 * p
    W_out = (W_pad - d * (K - 1) - 1) // s + 1
    assert W_out >= 1
    NH = N * H
    R = NH * W_out                       # real (unpadded) output positions

    x_pad = jnp.pad(x, ((0, 0), (0, 0), (0, 0), (p, p)))

    if s == 1:
        # Flat layout: lane r = t*NH + (n*H + h); tap k is a +k*d*NH lane shift.
        W_in = W_out + d * (K - 1)
        xs = jnp.transpose(x_pad[..., :W_in], (1, 3, 0, 2)).reshape(C, W_in * NH)
        halo = 128 * pl.cdiv(max((K - 1) * d * NH, 1), 128)
        T = halo * pl.cdiv(min(lane_tile, R), halo)        # multiple of halo and of 128
        n_tiles = pl.cdiv(R, T)
        L_x = (n_tiles + 1) * T                            # body tiles + last halo room
        x_flat = jnp.pad(xs, ((0, 0), (0, L_x - W_in * NH))).astype(jnp.bfloat16)
        offsets = tuple(k * d * NH for k in range(K))
        ratio = T // halo
        x_specs = [pl.BlockSpec((C, T), lambda i: (0, i)),
                   pl.BlockSpec((C, halo), lambda i: (0, (i + 1) * ratio))]
        x_args = [x_flat, x_flat]
    else:
        # TODO(synk): stride>1 fallback: per-tap decimation in the wrapper (K x bytes).
        T = 128 * pl.cdiv(min(lane_tile, R), 128)
        n_tiles = pl.cdiv(R, T)
        L_pad = n_tiles * T
        slabs = []
        for k in range(K):
            sl = x_pad[..., k * d: k * d + s * (W_out - 1) + 1: s]       # [N,C,H,W_out]
            sl = jnp.transpose(sl, (1, 3, 0, 2)).reshape(C, R)
            slabs.append(jnp.pad(sl, ((0, 0), (0, L_pad - R))))
        x_flat = jnp.concatenate(slabs, axis=1).astype(jnp.bfloat16)     # [C, K*L_pad]
        offsets = None
        x_specs = [pl.BlockSpec((C, T), (lambda i, kk=k: (0, kk * n_tiles + i)))
                   for k in range(K)]
        x_args = [x_flat] * K

    n_x = len(x_args)
    L_out_pad = n_tiles * T

    # weight [2C, C, 1, K] -> [2C, K*C] with column index k*C + c (matches tap stacking).
    w_mat = jnp.transpose(weight[:, :, 0, :], (0, 2, 1)).reshape(2 * C, K * C)
    w_bf = w_mat.astype(jnp.bfloat16)

    # Per-channel shift for numerically safer (shifted) batch statistics.
    x_mean = jnp.mean(x.astype(jnp.float32), axis=(0, 2, 3))
    m0 = (w_mat.astype(jnp.float32) @ jnp.tile(x_mean, K)).reshape(2 * C, 1)

    stats_kernel, fused_kernel = _make_kernels(C, T, R, offsets, n_x)
    grid = (n_tiles,)
    w_spec = pl.BlockSpec((2 * C, K * C), lambda i: (0, 0))
    small_spec = pl.BlockSpec((2 * C, 1), lambda i: (0, 0))

    # --- kernel A: masked, shifted per-tile batch statistics of the bias-free conv ---
    usum, usq = pl.pallas_call(
        stats_kernel,
        out_shape=(jax.ShapeDtypeStruct((n_tiles, 2 * C, 1), jnp.float32),
                   jax.ShapeDtypeStruct((n_tiles, 2 * C, 1), jnp.float32)),
        grid_spec=pltpu.PrefetchScalarGridSpec(
            num_scalar_prefetch=0,
            grid=grid,
            in_specs=x_specs + [w_spec, small_spec],
            out_specs=[pl.BlockSpec((1, 2 * C, 1), lambda i: (i, 0, 0)),
                       pl.BlockSpec((1, 2 * C, 1), lambda i: (i, 0, 0))]),
        compiler_params=pltpu.CompilerParams(dimension_semantics=("parallel",)),
    )(*x_args, w_bf, m0)

    # --- wrapper: fold BN (train-mode batch stats, biased var) into scale/shift ---
    U = jnp.sum(usum, axis=0)            # [2C, 1] sum of (y - m0)
    Q = jnp.sum(usq, axis=0)             # [2C, 1] sum of (y - m0)^2
    mean = m0 + U / R
    var = jnp.maximum(Q / R - (U / R) ** 2, 0.0)
    scale = gamma.astype(jnp.float32).reshape(2 * C, 1) / jnp.sqrt(var + eps)
    shift = beta.astype(jnp.float32).reshape(2 * C, 1) - scale * mean   # conv bias cancels

    # --- kernel B: fused conv recompute + BN affine + gated tanh/sigmoid ---
    gtu = pl.pallas_call(
        fused_kernel,
        out_shape=jax.ShapeDtypeStruct((C, L_out_pad), out_dtype),
        grid_spec=pltpu.PrefetchScalarGridSpec(
            num_scalar_prefetch=0,
            grid=grid,
            in_specs=x_specs + [w_spec, small_spec, small_spec],
            out_specs=pl.BlockSpec((C, T), lambda i: (0, i))),
        compiler_params=pltpu.CompilerParams(dimension_semantics=("parallel",)),
    )(*x_args, w_bf, scale, shift)

    # flat lanes (t*NH + nh) -> NCHW
    out = gtu[:, :R].reshape(C, W_out, N, H)
    out = jnp.transpose(out, (2, 0, 3, 1))
    return out.astype(out_dtype)


def gdc_reference(x, weight, bias, gamma, beta, *, time_strides, dilation, padding, eps=1e-5):
    """Pure-JAX reference matching the PyTorch forward (train-mode BN)."""
    C = x.shape[1]
    conv = lax.conv_general_dilated(
        x, weight,
        window_strides=(1, time_strides),
        padding=((0, 0), (padding, padding)),
        rhs_dilation=(1, dilation),
        dimension_numbers=("NCHW", "OIHW", "NCHW"),
        precision=lax.Precision.HIGHEST)
    conv = conv + bias[None, :, None, None]
    mean = conv.mean(axis=(0, 2, 3), keepdims=True)
    var = conv.var(axis=(0, 2, 3), keepdims=True)            # biased, as in BN train mode
    y = (conv - mean) / jnp.sqrt(var + eps)
    y = y * gamma[None, :, None, None] + beta[None, :, None, None]
    x_p = y[:, :C]
    x_q = y[:, C:]
    return jnp.tanh(x_p) * jax.nn.sigmoid(x_q)


if __name__ == "__main__":
    # small shapes consistent with the module: x [batch, in_channels, nodes, time]
    N, C, H, W = 2, 4, 16, 32
    K = 3

    key = jax.random.PRNGKey(0)
    k1, k2, k3, k4 = jax.random.split(key, 4)
    x = jax.random.normal(k1, (N, C, H, W), jnp.float32)
    # deterministic synthetic parameters (shapes from GDC.__init__)
    weight = 0.2 * jax.random.normal(k2, (2 * C, C, 1, K), jnp.float32)   # con2out.weight
    bias = 0.1 * jax.random.normal(k3, (2 * C,), jnp.float32)             # con2out.bias
    gamma = 1.0 + 0.1 * jax.random.normal(k4, (2 * C,), jnp.float32)      # bn.weight
    beta = jnp.linspace(-0.1, 0.1, 2 * C, dtype=jnp.float32)              # bn.bias

    configs = [
        dict(time_strides=1, dilation=1, padding=1, lane_tile=4096),  # single lane tile
        dict(time_strides=1, dilation=1, padding=1, lane_tile=512),   # multi-tile + halo + mask
        dict(time_strides=2, dilation=2, padding=2, lane_tile=512),   # strided fallback path
    ]
    for cfg in configs:
        s, d, p = cfg["time_strides"], cfg["dilation"], cfg["padding"]
        out = gdc_forward(x, weight, bias, gamma, beta,
                          time_strides=s, dilation=d, padding=p,
                          lane_tile=cfg["lane_tile"])
        out = jax.block_until_ready(out)
        ref = gdc_reference(x, weight, bias, gamma, beta,
                            time_strides=s, dilation=d, padding=p)
        W_out = (W + 2 * p - d * (K - 1) - 1) // s + 1
        assert out.shape == (N, C, H, W_out), (out.shape, cfg)
        err = float(jnp.max(jnp.abs(out - ref)))
        # bf16 matmul inputs with f32 accumulation: tolerance sized for bf16 rounding.
        assert err < 2e-2, f"max abs error {err} for {cfg}"
    print("KERNEL_OK")
</pallas_src>

<mosaic_0001>
module attributes {stable_mosaic.version = 11 : i64} {
  func.func @stats_kernel(%arg0: i32, %arg1: memref<4x1024xbf16, #tpu.memory_space<vmem>>, %arg2: memref<4x128xbf16, #tpu.memory_space<vmem>>, %arg3: memref<8x12xbf16, #tpu.memory_space<vmem>>, %arg4: memref<8x1xf32, #tpu.memory_space<vmem>>, %arg5: memref<1x8x1xf32, #tpu.memory_space<vmem>>, %arg6: memref<1x8x1xf32, #tpu.memory_space<vmem>>) attributes {dimension_semantics = [#tpu.dimension_semantics<parallel>], iteration_bounds = array<i64: 1>, scalar_prefetch = 0 : i64, scratch_operands = 0 : i64, tpu.core_type = #tpu.core_type<tc>, window_params = [{transform_indices = @transform_0, window_bounds = array<i64: 4, 1024>}, {transform_indices = @transform_1, window_bounds = array<i64: 4, 128>}, {pipeline_mode = #tpu.pipeline_mode<synchronous>, transform_indices = @transform_2, window_bounds = array<i64: 8, 12>}, {pipeline_mode = #tpu.pipeline_mode<synchronous>, transform_indices = @transform_3, window_bounds = array<i64: 8, 1>}, {transform_indices = @transform_4, window_bounds = array<i64: 1, 8, 1>}, {transform_indices = @transform_5, window_bounds = array<i64: 1, 8, 1>}]} {
    %c0 = arith.constant 0 : index
    %c0_0 = arith.constant 0 : index
    %0 = vector.load %arg1[%c0, %c0_0] : memref<4x1024xbf16, #tpu.memory_space<vmem>>, vector<4x1024xbf16>
    %c0_1 = arith.constant 0 : index
    %c0_2 = arith.constant 0 : index
    %1 = vector.load %arg2[%c0_1, %c0_2] : memref<4x128xbf16, #tpu.memory_space<vmem>>, vector<4x128xbf16>
    %2 = tpu.concatenate %0, %1 in 1 : vector<4x1024xbf16>, vector<4x128xbf16> -> vector<4x1152xbf16>
    %3 = vector.extract_strided_slice %2 {offsets = [0, 0], sizes = [4, 1024], strides = [1, 1]} : vector<4x1152xbf16> to vector<4x1024xbf16>
    %4 = vector.extract_strided_slice %2 {offsets = [0, 32], sizes = [4, 1024], strides = [1, 1]} : vector<4x1152xbf16> to vector<4x1024xbf16>
    %5 = vector.extract_strided_slice %2 {offsets = [0, 64], sizes = [4, 1024], strides = [1, 1]} : vector<4x1152xbf16> to vector<4x1024xbf16>
    %6 = tpu.concatenate %3, %4, %5 in 0 : vector<4x1024xbf16>, vector<4x1024xbf16>, vector<4x1024xbf16> -> vector<12x1024xbf16>
    %c0_3 = arith.constant 0 : index
    %c0_4 = arith.constant 0 : index
    %7 = vector.load %arg3[%c0_3, %c0_4] : memref<8x12xbf16, #tpu.memory_space<vmem>>, vector<8x12xbf16>
    %cst = arith.constant dense<0.000000e+00> : vector<8x1024xf32>
    %8 = tpu.matmul %7, %6, %cst {dimension_numbers = #tpu.dot_dimension_numbers<[1], [0], [0], [1], [0, 0, 1, 1], [], []>} : vector<8x12xbf16>, vector<12x1024xbf16>, vector<8x1024xf32> -> vector<8x1024xf32>
    %c0_5 = arith.constant 0 : index
    %c0_6 = arith.constant 0 : index
    %9 = vector.load %arg4[%c0_5, %c0_6] : memref<8x1xf32, #tpu.memory_space<vmem>>, vector<8x1xf32>
    %10 = vector.broadcast %9 : vector<8x1xf32> to vector<8x1024xf32>
    %11 = arith.subf %8, %10 : vector<8x1024xf32>
    %12 = tpu.iota {dimensions = array<i32: 1>} : vector<1x1024xi32>
    %c1024_i32 = arith.constant 1024 : i32
    %13 = arith.muli %arg0, %c1024_i32 : i32
    %14 = vector.broadcast %13 : i32 to vector<1x1024xi32>
    %15 = arith.addi %12, %14 : vector<1x1024xi32>
    %c1024_i32_7 = arith.constant 1024 : i32
    %16 = vector.broadcast %c1024_i32_7 : i32 to vector<1x1024xi32>
    %17 = arith.cmpi slt, %15, %16 : vector<1x1024xi32>
    %cst_8 = arith.constant 0.000000e+00 : f32
    %18 = vector.shape_cast %17 : vector<1x1024xi1> to vector<1x1024xi1>
    %19 = vector.broadcast %18 : vector<1x1024xi1> to vector<8x1024xi1>
    %20 = vector.broadcast %cst_8 : f32 to vector<8x1024xf32>
    %21 = arith.select %19, %11, %20 : vector<8x1024xi1>, vector<8x1024xf32>
    %cst_9 = arith.constant dense<0.000000e+00> : vector<8xf32>
    %22 = vector.multi_reduction <add>, %21, %cst_9 [1] : vector<8x1024xf32> to vector<8xf32>
    %23 = vector.shape_cast %22 : vector<8xf32> to vector<8x1xf32>
    %24 = vector.shape_cast %23 : vector<8x1xf32> to vector<1x8x1xf32>
    %c0_10 = arith.constant 0 : index
    %c0_11 = arith.constant 0 : index
    %c0_12 = arith.constant 0 : index
    %25 = vector.load %arg5[%c0_10, %c0_11, %c0_12] : memref<1x8x1xf32, #tpu.memory_space<vmem>>, vector<1x8x1xf32>
    tpu.vector_store %arg5[%c0_10, %c0_11, %c0_12], %24 {strides = array<i32>} : memref<1x8x1xf32, #tpu.memory_space<vmem>>, vector<1x8x1xf32>,
    %26 = arith.mulf %21, %21 : vector<8x1024xf32>
    %cst_13 = arith.constant dense<0.000000e+00> : vector<8xf32>
    %27 = vector.multi_reduction <add>, %26, %cst_13 [1] : vector<8x1024xf32> to vector<8xf32>
    %28 = vector.shape_cast %27 : vector<8xf32> to vector<8x1xf32>
    %29 = vector.shape_cast %28 : vector<8x1xf32> to vector<1x8x1xf32>
    %c0_14 = arith.constant 0 : index
    %c0_15 = arith.constant 0 : index
    %c0_16 = arith.constant 0 : index
    %30 = vector.load %arg6[%c0_14, %c0_15, %c0_16] : memref<1x8x1xf32, #tpu.memory_space<vmem>>, vector<1x8x1xf32>
    tpu.vector_store %arg6[%c0_14, %c0_15, %c0_16], %29 {strides = array<i32>} : memref<1x8x1xf32, #tpu.memory_space<vmem>>, vector<1x8x1xf32>,
    return
  }
  func.func @transform_0(%arg0: i32) -> (i32, i32) {
    %c0_i32 = arith.constant 0 : i32
    %c0_i32_0 = arith.constant 0 : i32
    return %c0_i32, %arg0 : i32, i32
  }
  func.func @transform_1(%arg0: i32) -> (i32, i32) {
    %c1_i32 = arith.constant 1 : i32
    %0 = arith.addi %arg0, %c1_i32 : i32
    %c8_i32 = arith.constant 8 : i32
    %1 = arith.muli %0, %c8_i32 : i32
    %c0_i32 = arith.constant 0 : i32
    %c0_i32_0 = arith.constant 0 : i32
    return %c0_i32, %1 : i32, i32
  }
  func.func @transform_2(%arg0: i32) -> (i32, i32) {
    %c0_i32 = arith.constant 0 : i32
    %c0_i32_0 = arith.constant 0 : i32
    %c0_i32_1 = arith.constant 0 : i32
    return %c0_i32, %c0_i32_0 : i32, i32
  }
  func.func @transform_3(%arg0: i32) -> (i32, i32) {
    %c0_i32 = arith.constant 0 : i32
    %c0_i32_0 = arith.constant 0 : i32
    %c0_i32_1 = arith.constant 0 : i32
    return %c0_i32, %c0_i32_0 : i32, i32
  }
  func.func @transform_4(%arg0: i32) -> (i32, i32, i32) {
    %c0_i32 = arith.constant 0 : i32
    %c0_i32_0 = arith.constant 0 : i32
    %c0_i32_1 = arith.constant 0 : i32
    return %arg0, %c0_i32, %c0_i32_0 : i32, i32, i32
  }
  func.func @transform_5(%arg0: i32) -> (i32, i32, i32) {
    %c0_i32 = arith.constant 0 : i32
    %c0_i32_0 = arith.constant 0 : i32
    %c0_i32_1 = arith.constant 0 : i32
    return %arg0, %c0_i32, %c0_i32_0 : i32, i32, i32
  }
}

</mosaic_0001>

<llo_original>
// kernel: tpu_custom_call.1
$region0: #{tpu_custom_call.1}
  #allocation0 [shape = 'u32[]', space=smem, size = 0x4, offset = 0x4, fixed_abs, tag = 'smem constant byte address 0x4 - core index']
  #allocation1 [shape = 'u32[72,128]{1,0:T(1,128)}', space=vmem, size = 0x9000, scoped, tag = 'internal scratch']
  %s0 = inlined_call_operand.hbm [shape: bf16[4,2048], index: 0, kind: input, shape index: {}]
  %s1 = inlined_call_operand.hbm [shape: bf16[4,2048], index: 1, kind: input, shape index: {}]
  %s2 = inlined_call_operand.vmem [shape: bf16[8,12], index: 2, kind: input, shape index: {}]
  %s3 = inlined_call_operand.vmem [shape: f32[8,1], index: 3, kind: input, shape index: {}]
  %s4 = inlined_call_operand.vmem [shape: f32[1,8,1], index: 4, kind: output, shape index: {0}]
  %s5 = inlined_call_operand.vmem [shape: f32[1,8,1], index: 5, kind: output, shape index: {1}]
  %6 = xla_tuple %s4, %s5
  %s7 = sld [smem:[#allocation0]]
  $region42: #{tpu_custom_call.1} parent=0
    _
  %s9 = ssub.s32 1, %s7
  %s10 = scalar_select 0, %s9, %s7
  $region1: #{tpu_custom_call.1} parent=0
    #allocation2 [shape = 'u8[8192]{0}', space=vmem, size = 0x2000, scoped, tag = 'input window, operand 0, single buffered']
    #allocation3 [shape = 's32[1]{0}', space=sflag, size = 0x4, scoped, tag = 'scoped memory for tpu_custom_call.1']
    #allocation4 [shape = 'u8[1024]{0}', space=vmem, size = 0x400, scoped, tag = 'input window, operand 1, single buffered']
    #allocation5 [shape = 's32[1]{0}', space=sflag, size = 0x4, scoped, tag = 'scoped memory for tpu_custom_call.1']
    %11 = vsyncpa [#allocation3], 0
    %12 = vsyncpa [#allocation5], 0
    // Predicated region
    $region2: #{tpu_custom_call.1} parent=1 // pred_check
      _
    $region3: #{tpu_custom_call.1} parent=1 // pred_check_branch
      %14 = sbr.rel (0) target = $region5
    $region4: #{tpu_custom_call.1} parent=1 // pred_region
      %16 = vsyncadd [#allocation3], 0
      %s18 = sshll.u32 %s0, 4
      %s19 = int_to_ptr.hbm [resolvable:$true] %s18
      %s20 = sshll.u32 [#allocation2], 4
      %s21 = int_to_ptr.vmem [resolvable:$true] %s20
      %23 = dma.hbm_to_vmem [thread:$0]  %s19, 256, %s21, [#allocation3]
    $region5: #{tpu_custom_call.1} parent=1 // pred_fallthru
      _
    // Predicated region
    $region6: #{tpu_custom_call.1} parent=1 // pred_check
      _
    $region7: #{tpu_custom_call.1} parent=1 // pred_check_branch
      %25 = sbr.rel (0) target = $region9
    $region8: #{tpu_custom_call.1} parent=1 // pred_region
      %s26 = sadd.s32 0, 1
      %s27 = smul.u32 %s26, 8
      %29 = vsyncadd [#allocation5], 0
      %s30 = smul.addr %s27, 2
      %s31 = scalar_lea.hbm %s1, %s30
      %s33 = sshll.u32 %s31, 4
      %s34 = int_to_ptr.hbm [resolvable:$true] %s33
      %s35 = sshll.u32 [#allocation4], 4
      %s36 = int_to_ptr.vmem [resolvable:$true] %s35
      %38 = dma.hbm_to_vmem [thread:$0]  %s34, 32, %s36, [#allocation5]
    $region9: #{tpu_custom_call.1} parent=1 // pred_fallthru
      _
    // Predicated region
    $region10: #{tpu_custom_call.1} parent=1 // pred_check
      _
    $region11: #{tpu_custom_call.1} parent=1 // pred_check_branch
      %40 = sbr.rel (0) target = $region13
    $region12: #{tpu_custom_call.1} parent=1 // pred_region
      _
    $region13: #{tpu_custom_call.1} parent=1 // pred_fallthru
      _
    // Predicated region
    $region14: #{tpu_custom_call.1} parent=1 // pred_check
      _
    $region15: #{tpu_custom_call.1} parent=1 // pred_check_branch
      %42 = sbr.rel (0) target = $region17
    $region16: #{tpu_custom_call.1} parent=1 // pred_region
      _
    $region17: #{tpu_custom_call.1} parent=1 // pred_fallthru
      _
    // Predicated region
    $region18: #{tpu_custom_call.1} parent=1 // pred_check
      _
    $region19: #{tpu_custom_call.1} parent=1 // pred_check_branch
      %44 = sbr.rel (0) target = $region21
    $region20: #{tpu_custom_call.1} parent=1 // pred_region
      %46 = dma.done [#allocation3], 256
    $region21: #{tpu_custom_call.1} parent=1 // pred_fallthru
      _
    // Predicated region
    $region22: #{tpu_custom_call.1} parent=1 // pred_check
      _
    $region23: #{tpu_custom_call.1} parent=1 // pred_check_branch
      %48 = sbr.rel (0) target = $region25
    $region24: #{tpu_custom_call.1} parent=1 // pred_region
      %50 = dma.done [#allocation5], 32
    $region25: #{tpu_custom_call.1} parent=1 // pred_fallthru
      _
    %s51 = sadd.s32 0, 1
    %s52 = smul.u32 %s51, 8
    %v54 = vld [vmem:[#allocation2] sm:$0xff]
    %v55 = vld [vmem:[#allocation2 + $0x8] sm:$0xff]
    %v56 = vld [vmem:[#allocation4] sm:$0x3]
    %58 = vst [vmem:[#allocation1] ss:$4 sm:$0xff] %v54
    %s60 = scalar_lea.vmem [#allocation1], 32
    %61 = vst [vmem:[%s60] ss:$4 sm:$0xff] %v55
    %v62 = vld.sshfl [vmem:[#allocation1] sm:$0xff pattern:$0x73625140]
    %v64 = vld.sshfl [vmem:[#allocation1 + $0x8] sm:$0xff pattern:$0x73625140]
    %v66 = vld.sshfl [vmem:[#allocation1 + $0x10] sm:$0xff pattern:$0x73625140]
    %v68 = vld.sshfl [vmem:[#allocation1 + $0x18] sm:$0xff pattern:$0x73625140]
    %v70 = vld.sshfl [vmem:[#allocation1 + $0x20] sm:$0xff pattern:$0x73625140]
    %v72 = vld.sshfl [vmem:[#allocation1 + $0x28] sm:$0xff pattern:$0x73625140]
    %v74 = vld.sshfl [vmem:[#allocation1 + $0x30] sm:$0xff pattern:$0x73625140]
    %v76 = vld.sshfl [vmem:[#allocation1 + $0x38] sm:$0xff pattern:$0x73625140]
    %v79 = vrot.slane %v62, 6
    %v80 = vrot.slane %v64, 6
    %v81 = vrot.slane %v66, 6
    %v82 = vrot.slane %v68, 6
    %v83 = vrot.slane %v70, 6
    %v84 = vrot.slane %v72, 6
    %v85 = vrot.slane %v74, 6
    %v86 = vrot.slane %v76, 6
    %v87 = vrot.slane %v56, 6
    %88 = vrot.lane.b32.xlu0 %v79, 96
    %v89 = vpop.permute.xlu0 %88
    %90 = vrot.lane.b32.xlu0 %v80, 96
    %v91 = vpop.permute.xlu0 %90
    %92 = vrot.lane.b32.xlu0 %v81, 96
    %v93 = vpop.permute.xlu0 %92
    %94 = vrot.lane.b32.xlu0 %v82, 96
    %v95 = vpop.permute.xlu0 %94
    %96 = vrot.lane.b32.xlu0 %v83, 96
    %v97 = vpop.permute.xlu0 %96
    %98 = vrot.lane.b32.xlu0 %v84, 96
    %v99 = vpop.permute.xlu0 %98
    %100 = vrot.lane.b32.xlu0 %v85, 96
    %v101 = vpop.permute.xlu0 %100
    %102 = vrot.lane.b32.xlu0 %v86, 96
    %v103 = vpop.permute.xlu0 %102
    %104 = vrot.lane.b32.xlu0 %v87, 96
    %v105 = vpop.permute.xlu0 %104
    %vm106 = vcmask 785408
    %v107 = vsel %vm106, %v89, %v91
    %v108 = vsel %vm106, %v91, %v93
    %v109 = vsel %vm106, %v93, %v95
    %v110 = vsel %vm106, %v95, %v97
    %v111 = vsel %vm106, %v97, %v99
    %v112 = vsel %vm106, %v99, %v101
    %v113 = vsel %vm106, %v101, %v103
    %v114 = vsel %vm106, %v103, %v105
    %v115 = vrot.slane %v62, 4
    %v116 = vrot.slane %v64, 4
    %v117 = vrot.slane %v66, 4
    %v118 = vrot.slane %v68, 4
    %v119 = vrot.slane %v70, 4
    %v120 = vrot.slane %v72, 4
    %v121 = vrot.slane %v74, 4
    %v122 = vrot.slane %v76, 4
    %v123 = vrot.slane %v56, 4
    %124 = vrot.lane.b32.xlu0 %v115, 64
    %v125 = vpop.permute.xlu0 %124
    %126 = vrot.lane.b32.xlu0 %v116, 64
    %v127 = vpop.permute.xlu0 %126
    %128 = vrot.lane.b32.xlu0 %v117, 64
    %v129 = vpop.permute.xlu0 %128
    %130 = vrot.lane.b32.xlu0 %v118, 64
    %v131 = vpop.permute.xlu0 %130
    %132 = vrot.lane.b32.xlu0 %v119, 64
    %v133 = vpop.permute.xlu0 %132
    %134 = vrot.lane.b32.xlu0 %v120, 64
    %v135 = vpop.permute.xlu0 %134
    %136 = vrot.lane.b32.xlu0 %v121, 64
    %v137 = vpop.permute.xlu0 %136
    %138 = vrot.lane.b32.xlu0 %v122, 64
    %v139 = vpop.permute.xlu0 %138
    %140 = vrot.lane.b32.xlu0 %v123, 64
    %v141 = vpop.permute.xlu0 %140
    %vm142 = vcmask 523264
    %v143 = vsel %vm142, %v125, %v127
    %v144 = vsel %vm142, %v127, %v129
    %v145 = vsel %vm142, %v129, %v131
    %v146 = vsel %vm142, %v131, %v133
    %v147 = vsel %vm142, %v133, %v135
    %v148 = vsel %vm142, %v135, %v137
    %v149 = vsel %vm142, %v137, %v139
    %v150 = vsel %vm142, %v139, %v141
    %vm151 = vcmask 1041408
    %v153 = vsel %vm151, %v62, %v107
    %v155 = vsel %vm151, %v64, %v108
    %v157 = vsel %vm151, %v66, %v109
    %v159 = vsel %vm151, %v68, %v110
    %v161 = vsel %vm151, %v70, %v111
    %v163 = vsel %vm151, %v72, %v112
    %v165 = vsel %vm151, %v74, %v113
    %v167 = vsel %vm151, %v76, %v114
    %vm168 = vcmask 1043456
    %v170 = vsel %vm168, %v153, %v143
    %v172 = vsel %vm168, %v155, %v144
    %v174 = vsel %vm168, %v157, %v145
    %v176 = vsel %vm168, %v159, %v146
    %v178 = vsel %vm168, %v161, %v147
    %v180 = vsel %vm168, %v163, %v148
    %v182 = vsel %vm168, %v165, %v149
    %v184 = vsel %vm168, %v167, %v150
    %v185 = vld [vmem:[%s2] sm:$0xf]
    %vm186 = vcmask 97280
    %v188 = vsel %vm186, %v185, 0
    %vm190 = vcmask 1045504
    %v191 = vsel %vm190, %v170, 0
    %v193 = vsel %vm190, %v172, 0
    %v195 = vsel %vm190, %v174, 0
    %v197 = vsel %vm190, %v176, 0
    %v199 = vsel %vm190, %v178, 0
    %v201 = vsel %vm190, %v180, 0
    %v203 = vsel %vm190, %v182, 0
    %v205 = vsel %vm190, %v184, 0
    %207 = vmatpush.bf16.msra.mxu0 0
    %208 = vmatpush.bf16.msra.mxu0 0
    %209 = vmatpush.bf16.msra.mxu0 0
    %210 = vmatpush.bf16.msra.mxu0 0
    %211 = vmatpush.bf16.msra.mxu0 0
    %212 = vmatpush.bf16.msra.mxu0 0
    %213 = vmatpush.bf16.msra.mxu0 0
    %214 = vmatpush.bf16.msra.mxu0 %v191
    %215 = vmatmul.bf16.gmra.mxu0 %v188
    %v216 = vpop.f32.mrf.mxu0
    %v217 = vadd.f32 0.0, %v216
    %v218 = vpop.f32.mrf.mxu0
    %219 = vdwg.mxu0
    %220 = vmatpush.bf16.msra.mxu0 0
    %221 = vmatpush.bf16.msra.mxu0 0
    %222 = vmatpush.bf16.msra.mxu0 0
    %223 = vmatpush.bf16.msra.mxu0 0
    %224 = vmatpush.bf16.msra.mxu0 0
    %225 = vmatpush.bf16.msra.mxu0 0
    %226 = vmatpush.bf16.msra.mxu0 0
    %227 = vmatpush.bf16.msra.mxu0 %v193
    %228 = vmatmul.bf16.gmra.mxu0 %v188
    %v229 = vpop.f32.mrf.mxu0
    %v230 = vadd.f32 0.0, %v229
    %v231 = vpop.f32.mrf.mxu0
    %232 = vdwg.mxu0
    %233 = vmatpush.bf16.msra.mxu0 0
    %234 = vmatpush.bf16.msra.mxu0 0
    %235 = vmatpush.bf16.msra.mxu0 0
    %236 = vmatpush.bf16.msra.mxu0 0
    %237 = vmatpush.bf16.msra.mxu0 0
    %238 = vmatpush.bf16.msra.mxu0 0
    %239 = vmatpush.bf16.msra.mxu0 0
    %240 = vmatpush.bf16.msra.mxu0 %v195
    %241 = vmatmul.bf16.gmra.mxu0 %v188
    %v242 = vpop.f32.mrf.mxu0
    %v243 = vadd.f32 0.0, %v242
    %v244 = vpop.f32.mrf.mxu0
    %245 = vdwg.mxu0
    %246 = vmatpush.bf16.msra.mxu0 0
    %247 = vmatpush.bf16.msra.mxu0 0
    %248 = vmatpush.bf16.msra.mxu0 0
    %249 = vmatpush.bf16.msra.mxu0 0
    %250 = vmatpush.bf16.msra.mxu0 0
    %251 = vmatpush.bf16.msra.mxu0 0
    %252 = vmatpush.bf16.msra.mxu0 0
    %253 = vmatpush.bf16.msra.mxu0 %v197
    %254 = vmatmul.bf16.gmra.mxu0 %v188
    %v255 = vpop.f32.mrf.mxu0
    %v256 = vadd.f32 0.0, %v255
    %v257 = vpop.f32.mrf.mxu0
    %258 = vdwg.mxu0
    %259 = vmatpush.bf16.msra.mxu0 0
    %260 = vmatpush.bf16.msra.mxu0 0
    %261 = vmatpush.bf16.msra.mxu0 0
    %262 = vmatpush.bf16.msra.mxu0 0
    %263 = vmatpush.bf16.msra.mxu0 0
    %264 = vmatpush.bf16.msra.mxu0 0
    %265 = vmatpush.bf16.msra.mxu0 0
    %266 = vmatpush.bf16.msra.mxu0 %v199
    %267 = vmatmul.bf16.gmra.mxu0 %v188
    %v268 = vpop.f32.mrf.mxu0
    %v269 = vadd.f32 0.0, %v268
    %v270 = vpop.f32.mrf.mxu0
    %271 = vdwg.mxu0
    %272 = vmatpush.bf16.msra.mxu0 0
    %273 = vmatpush.bf16.msra.mxu0 0
    %274 = vmatpush.bf16.msra.mxu0 0
    %275 = vmatpush.bf16.msra.mxu0 0
    %276 = vmatpush.bf16.msra.mxu0 0
    %277 = vmatpush.bf16.msra.mxu0 0
    %278 = vmatpush.bf16.msra.mxu0 0
    %279 = vmatpush.bf16.msra.mxu0 %v201
    %280 = vmatmul.bf16.gmra.mxu0 %v188
    %v281 = vpop.f32.mrf.mxu0
    %v282 = vadd.f32 0.0, %v281
    %v283 = vpop.f32.mrf.mxu0
    %284 = vdwg.mxu0
    %285 = vmatpush.bf16.msra.mxu0 0
    %286 = vmatpush.bf16.msra.mxu0 0
    %287 = vmatpush.bf16.msra.mxu0 0
    %288 = vmatpush.bf16.msra.mxu0 0
    %289 = vmatpush.bf16.msra.mxu0 0
    %290 = vmatpush.bf16.msra.mxu0 0
    %291 = vmatpush.bf16.msra.mxu0 0
    %292 = vmatpush.bf16.msra.mxu0 %v203
    %293 = vmatmul.bf16.gmra.mxu0 %v188
    %v294 = vpop.f32.mrf.mxu0
    %v295 = vadd.f32 0.0, %v294
    %v296 = vpop.f32.mrf.mxu0
    %297 = vdwg.mxu0
    %298 = vmatpush.bf16.msra.mxu0 0
    %299 = vmatpush.bf16.msra.mxu0 0
    %300 = vmatpush.bf16.msra.mxu0 0
    %301 = vmatpush.bf16.msra.mxu0 0
    %302 = vmatpush.bf16.msra.mxu0 0
    %303 = vmatpush.bf16.msra.mxu0 0
    %304 = vmatpush.bf16.msra.mxu0 0
    %305 = vmatpush.bf16.msra.mxu0 %v205
    %306 = vmatmul.bf16.gmra.mxu0 %v188
    %v307 = vpop.f32.mrf.mxu0
    %v308 = vadd.f32 0.0, %v307
    %v309 = vpop.f32.mrf.mxu0
    %310 = vdwg.mxu0
    %v311 = vld [vmem:[%s3] sm:$0xff]
    %313 = vset.pattern.permute.xlu0 0
    %314 = vperm.xlu0 %313, %v311
    %v315 = vpop.permute.xlu0 %314
    %v317 = vsub.f32 %v217, %v315
    %v318 = vsub.f32 %v230, %v315
    %v319 = vsub.f32 %v243, %v315
    %v320 = vsub.f32 %v256, %v315
    %v321 = vsub.f32 %v269, %v315
    %v322 = vsub.f32 %v282, %v315
    %v323 = vsub.f32 %v295, %v315
    %v324 = vsub.f32 %v308, %v315
    %v325 = vlaneseq
    %v326 = vand.u32 %v325, 127
    %v327 = vadd.s32 %v326, 128
    %v328 = vadd.s32 %v326, 256
    %v329 = vadd.s32 %v326, 384
    %v330 = vadd.s32 %v326, 512
    %v331 = vadd.s32 %v326, 640
    %v332 = vadd.s32 %v326, 768
    %v333 = vadd.s32 %v326, 896
    %s334 = smul.u32 0, 1024
    %v335 = vstv %s334
    %v336 = vadd.s32 %v326, %v335
    %v337 = vadd.s32 %v327, %v335
    %v338 = vadd.s32 %v328, %v335
    %v339 = vadd.s32 %v329, %v335
    %v340 = vadd.s32 %v330, %v335
    %v341 = vadd.s32 %v331, %v335
    %v342 = vadd.s32 %v332, %v335
    %v343 = vadd.s32 %v333, %v335
    %vm344 = vcmp.lt.s32.totalorder %v336, 1024
    %vm345 = vcmp.lt.s32.totalorder %v337, 1024
    %vm346 = vcmp.lt.s32.totalorder %v338, 1024
    %vm347 = vcmp.lt.s32.totalorder %v339, 1024
    %vm348 = vcmp.lt.s32.totalorder %v340, 1024
    %vm349 = vcmp.lt.s32.totalorder %v341, 1024
    %vm350 = vcmp.lt.s32.totalorder %v342, 1024
    %vm351 = vcmp.lt.s32.totalorder %v343, 1024
    %v352 = vsel %vm344, 1, 0
    %v353 = vsel %vm345, 1, 0
    %v354 = vsel %vm346, 1, 0
    %v355 = vsel %vm347, 1, 0
    %v356 = vsel %vm348, 1, 0
    %v357 = vsel %vm349, 1, 0
    %v358 = vsel %vm350, 1, 0
    %v359 = vsel %vm351, 1, 0
    %vm360 = vcmp.eq.s32.totalorder %v352, 1
    %vm361 = vcmp.eq.s32.totalorder %v353, 1
    %vm362 = vcmp.eq.s32.totalorder %v354, 1
    %vm363 = vcmp.eq.s32.totalorder %v355, 1
    %vm364 = vcmp.eq.s32.totalorder %v356, 1
    %vm365 = vcmp.eq.s32.totalorder %v357, 1
    %vm366 = vcmp.eq.s32.totalorder %v358, 1
    %vm367 = vcmp.eq.s32.totalorder %v359, 1
    %v368 = vsel %vm360, %v317, 0.0
    %v369 = vsel %vm361, %v318, 0.0
    %v370 = vsel %vm362, %v319, 0.0
    %v371 = vsel %vm363, %v320, 0.0
    %v372 = vsel %vm364, %v321, 0.0
    %v373 = vsel %vm365, %v322, 0.0
    %v374 = vsel %vm366, %v323, 0.0
    %v375 = vsel %vm367, %v324, 0.0
    %v376 = vadd.f32 %v368, %v369
    %v377 = vadd.f32 %v376, %v370
    %v378 = vadd.f32 %v377, %v371
    %v379 = vadd.f32 %v378, %v372
    %v380 = vadd.f32 %v379, %v373
    %v381 = vadd.f32 %v380, %v374
    %v382 = vadd.f32 %v381, %v375
    %383 = vadd.xlane.f32.xlu0 %v382
    %v384 = vpop.xlane.xlu0 %383
    %vm385 = vcmask 7168
    %386 = vst.msk [vmem:[%s4] sm:$0xff] %vm385, %v384
    %v387 = vmul.f32 %v368, %v368
    %v388 = vmul.f32 %v369, %v369
    %v389 = vmul.f32 %v370, %v370
    %v390 = vmul.f32 %v371, %v371
    %v391 = vmul.f32 %v372, %v372
    %v392 = vmul.f32 %v373, %v373
    %v393 = vmul.f32 %v374, %v374
    %v394 = vmul.f32 %v375, %v375
    %v395 = vadd.f32 %v387, %v388
    %v396 = vadd.f32 %v395, %v389
    %v397 = vadd.f32 %v396, %v390
    %v398 = vadd.f32 %v397, %v391
    %v399 = vadd.f32 %v398, %v392
    %v400 = vadd.f32 %v399, %v393
    %v401 = vadd.f32 %v400, %v394
    %402 = vadd.xlane.f32.xlu0 %v401
    %v403 = vpop.xlane.xlu0 %402
    %404 = vst.msk [vmem:[%s5] sm:$0xff] %vm385, %v403
    // Predicated region
    $region26: #{tpu_custom_call.1} parent=1 // pred_check
      _
    $region27: #{tpu_custom_call.1} parent=1 // pred_check_branch
      %406 = sbr.rel (0) target = $region29
    $region28: #{tpu_custom_call.1} parent=1 // pred_region
      _
    $region29: #{tpu_custom_call.1} parent=1 // pred_fallthru
      _
    // Predicated region
    $region30: #{tpu_custom_call.1} parent=1 // pred_check
      _
    $region31: #{tpu_custom_call.1} parent=1 // pred_check_branch
      %408 = sbr.rel (0) target = $region33
    $region32: #{tpu_custom_call.1} parent=1 // pred_region
      _
    $region33: #{tpu_custom_call.1} parent=1 // pred_fallthru
      _
    // Predicated region
    $region34: #{tpu_custom_call.1} parent=1 // pred_check
      _
    $region35: #{tpu_custom_call.1} parent=1 // pred_check_branch
      %410 = sbr.rel (0) target = $region37
    $region36: #{tpu_custom_call.1} parent=1 // pred_region
      _
    $region37: #{tpu_custom_call.1} parent=1 // pred_fallthru
      _
    // Predicated region
    $region38: #{tpu_custom_call.1} parent=1 // pred_check
      _
    $region39: #{tpu_custom_call.1} parent=1 // pred_check_branch
      %412 = sbr.rel (0) target = $region41
    $region40: #{tpu_custom_call.1} parent=1 // pred_region
      _
    $region41: #{tpu_custom_call.1} parent=1 // pred_fallthru
      _
    %413 = vsyncpa [#allocation3], 1
    %414 = vsyncpa [#allocation5], 1

</llo_original>
